<compile_context>
chip_gen: v5e
topology: v5e:2x2
jax: 0.10.0
libtpu: 0.0.40
codegen_flags: <defaults>
</compile_context>

<pallas_src>
import jax
import jax.numpy as jnp
from jax.experimental import pallas as pl
from jax.experimental.pallas import tpu as pltpu


# ----------------------------- kernel -----------------------------

def _shifted(t, d, lidx, L):
    """s[r] = t[r + d] if row r+d lies in the same length-L sequence, else 0.  d static."""
    if d == 0:
        return t
    rows = t.shape[0]
    rolled = pltpu.roll(t, shift=(-d) % rows, axis=0)   # rolled[r] = t[(r + d) % rows]
    valid = jnp.logical_and(lidx + d >= 0, lidx + d < L)
    return jnp.where(valid, rolled, 0.0)


def _conv1d_taps(v, w_ref, lidx, L):
    """'same'-padded 1-D conv (stride 1, odd K) as K MXU matmuls with shifted/masked OUTPUTS.

    Output row r of the conv needs v[r+d] @ W[k] (d = k - K//2).  Computing the unshifted
    t = v @ W[k] for all rows and then rolling/masking t is mathematically identical to shifting
    the input, but it moves the narrower (conv2: 128 lanes) / equal (conv1 at 512->512) f32
    accumulator through the XLU instead of the wide bf16 activations, keeps every roll in 32-bit,
    and avoids a wide shifted live temporary.

    v: (rows, Cin) bf16.  w_ref: (K, Cin, Cout) bf16, VMEM-resident.  Returns (rows, Cout) f32.
    """
    K = w_ref.shape[0]
    acc = None
    for k in range(K):                                   # K in {5, 3}: static unroll
        d = k - K // 2
        t = jnp.dot(v, w_ref[k], preferred_element_type=jnp.float32)   # bf16 x bf16 -> f32
        t = _shifted(t, d, lidx, L)
        acc = t if acc is None else acc + t
    return acc


def _convnet_kernel(x_ref,        # (bt, L, Cin)   activations (only per-step mover)
                    bn_a_ref,     # (1, Cin) f32   folded eval-BN scale  * s1
                    bn_b_ref,     # (1, Cin) f32   folded eval-BN shift  * s1
                    w1_ref,       # (K1, Cin, H)   bf16 weight_norm direction V1
                    b1_ref,       # (1, H)   f32
                    w2_ref,       # (K2, H, OUTP)  bf16 s2*V2, OUTP = 128-padded labels
                    b2_ref,       # (1, OUTP) f32
                    o_ref):       # (bt, L, OUTP)  bf16
    bt, L, cin = x_ref.shape
    outp = o_ref.shape[-1]
    rows = bt * L

    # local (within-sequence) position of every flattened row, for conv boundary masking
    lidx = jax.lax.broadcasted_iota(jnp.int32, (rows, 1), 0) % L

    # Eval BatchNorm1d + weight_norm scalar s1, folded to one per-channel affine (f32),
    # then a single cast to bf16 so both matmuls run at native MXU rate.
    x = x_ref[...].reshape(rows, cin).astype(jnp.float32)
    x = (x * bn_a_ref[...] + bn_b_ref[...]).astype(jnp.bfloat16)

    h = _conv1d_taps(x, w1_ref, lidx, L) + b1_ref[...]          # f32 accumulate + bias
    h = jnp.maximum(h, 0.0).astype(jnp.bfloat16)                # ReLU; Dropout(p=0.0)==identity

    o = _conv1d_taps(h, w2_ref, lidx, L) + b2_ref[...]          # s2 already folded into w2
    o_ref[...] = o.reshape(bt, L, outp).astype(o_ref.dtype)     # lane-dense 128-wide bf16 store


# ----------------------------- wrapper -----------------------------

def _vmem_capacity_bytes():
    """Physical VMEM per TensorCore if queryable (v5e/v6e 128 MiB, v7x 64 MiB), else None."""
    try:
        return int(pltpu.get_tpu_info().vmem_capacity_bytes)
    except Exception:
        return None


def _pick_batch_tile(B, L, cin, hid, out_pad, k1, k2, x_bytes, budget_bytes, target_rows=1024):
    """Largest bt with bt*L ~ target_rows that fits the VMEM budget, keeping >= 2 grid steps."""
    # grid-resident params (worst case: pipeliner keeps two copies of the constant blocks)
    fixed = 2 * ((k1 * cin * hid + k2 * hid * out_pad) * 2 + (2 * cin + hid + out_pad) * 4)
    # per flattened row: double-buffered in/out blocks + in-kernel live temporaries
    per_row = (2 * cin * x_bytes + 2 * out_pad * 2          # x block, bf16 out block (x2 bufs)
               + cin * (4 + 2) + hid * (4 + 2) + out_pad * 4)  # x f32+bf16, h f32+bf16, acc f32
    avail = max(budget_bytes - fixed, per_row * L)
    bt = max(1, min(B, max(1, target_rows // L), avail // (per_row * L)))
    if bt == B and B >= 2:
        bt = -(-B // 2)   # keep n_steps >= 2 so v7x's 2nd TensorCore gets work on the batch axis
    return int(bt)


def convnet_classify_pallas(x, bn_gamma, bn_beta, bn_mean, bn_var,
                            v1, g1, b1, v2, g2, b2,
                            *, eps=1e-5, batch_tile=None):
    """Pallas forward of ConvNet: BN(eval) -> WN-Conv1d(k=5) -> ReLU -> WN-Conv1d(k=3)."""
    B, L, cin = x.shape
    hid, _, k1 = v1.shape
    out_dim, _, k2 = v2.shape
    out_dtype = x.dtype

    # --- one-time parameter prep (layout + weight_norm fold); cacheable across calls ---
    # weight_norm(dim=None): W_eff = g * V / ||V||_F -> scalar scales s1, s2.
    s1 = (g1 / jnp.sqrt(jnp.sum(v1.astype(jnp.float32) ** 2))).astype(jnp.float32)
    s2 = (g2 / jnp.sqrt(jnp.sum(v2.astype(jnp.float32) ** 2))).astype(jnp.float32)

    # PyTorch Conv1d weight (out, in, K) -> per-tap matmul layout (K, in, out), bf16 for the MXU.
    w1t = jnp.transpose(v1, (2, 1, 0)).astype(jnp.bfloat16)                      # (K1, Cin, H)
    w2t = (jnp.transpose(v2, (2, 1, 0)).astype(jnp.float32) * s2).astype(jnp.bfloat16)
    out_pad = max(128, -(-out_dim // 128) * 128)        # lane-dense 128-wide output store
    w2t = jnp.pad(w2t, ((0, 0), (0, 0), (0, out_pad - out_dim)))                 # (K2, H, OUTP)
    b2p = jnp.pad(b2.astype(jnp.float32), (0, out_pad - out_dim)).reshape(1, out_pad)
    b1r = b1.astype(jnp.float32).reshape(1, hid)

    # Folded eval-mode BatchNorm1d with s1 folded in (conv is linear in its input -> exact):
    #   conv_{s1*V1}(y) == conv_{V1}(s1*y), so y = x * (s1*scale) + (s1*shift).
    inv_std = 1.0 / jnp.sqrt(bn_var.astype(jnp.float32) + eps)
    bn_a = (s1 * bn_gamma.astype(jnp.float32) * inv_std).reshape(1, cin)
    bn_b = (s1 * (bn_beta.astype(jnp.float32)
                  - bn_mean.astype(jnp.float32) * bn_gamma.astype(jnp.float32) * inv_std)
            ).reshape(1, cin)

    # --- batch tiling + VMEM budgeting ---
    vmem_phys = _vmem_capacity_bytes()
    vmem_limit = None if vmem_phys is None else (vmem_phys * 3) // 4   # > v5e's 16 MiB default
    tile_budget = (16 << 20) if vmem_phys is None else vmem_phys // 2  # headroom for the tiles

    x_bytes = jnp.dtype(x.dtype).itemsize
    bt = batch_tile if batch_tile is not None else _pick_batch_tile(
        B, L, cin, hid, out_pad, k1, k2, x_bytes, tile_budget)
    bt = max(1, min(int(bt), B))
    n_steps = pl.cdiv(B, bt)
    b_pad = n_steps * bt
    if b_pad != B:
        x = jnp.pad(x, ((0, b_pad - B), (0, 0), (0, 0)))

    flops = 2 * b_pad * L * (k1 * cin * hid + k2 * hid * out_pad)
    bytes_accessed = (b_pad * L * cin * x_bytes          # activation read
                      + b_pad * L * out_pad * 2          # bf16 logits write
                      + (w1t.size + w2t.size) * 2        # bf16 resident weights
                      + (2 * cin + hid + out_pad) * 4)   # f32 BN vectors + biases

    out = pl.pallas_call(
        _convnet_kernel,
        out_shape=jax.ShapeDtypeStruct((b_pad, L, out_pad), jnp.bfloat16),
        grid_spec=pltpu.PrefetchScalarGridSpec(
            num_scalar_prefetch=0,
            grid=(n_steps,),
            in_specs=[
                pl.BlockSpec((bt, L, cin), lambda i: (i, 0, 0)),        # activations (only mover)
                pl.BlockSpec((1, cin), lambda i: (0, 0)),               # resident BN*s1 scale
                pl.BlockSpec((1, cin), lambda i: (0, 0)),               # resident BN*s1 shift
                pl.BlockSpec((k1, cin, hid), lambda i: (0, 0, 0)),      # resident V1 (bf16)
                pl.BlockSpec((1, hid), lambda i: (0, 0)),               # resident b1
                pl.BlockSpec((k2, hid, out_pad), lambda i: (0, 0, 0)),  # resident s2*V2 (bf16)
                pl.BlockSpec((1, out_pad), lambda i: (0, 0)),           # resident b2
            ],
            out_specs=pl.BlockSpec((bt, L, out_pad), lambda i: (i, 0, 0)),
        ),
        compiler_params=pltpu.CompilerParams(
            dimension_semantics=("parallel",),          # batch grid shards across TCs (v7x)
            vmem_limit_bytes=vmem_limit),
        cost_estimate=pl.CostEstimate(
            flops=int(flops), transcendentals=0, bytes_accessed=int(bytes_accessed)),
    )(x, bn_a, bn_b, w1t, b1r, w2t, b2p)

    # slice away batch/lane padding; restore caller dtype (tiny: num_labels columns only)
    return out[:B, :, :out_dim].astype(out_dtype)


def sequence_to_sequence_head_forward(sequence_output, params, targets=None,
                                      ignore_index=-1, batch_tile=None):
    """Mirrors SequenceToSequenceClassificationHead.forward (loss/accuracy in plain JAX)."""
    logits = convnet_classify_pallas(sequence_output, *params, batch_tile=batch_tile)
    outputs = (logits,)
    if targets is None:
        return outputs
    num_labels = logits.shape[-1]
    flat = logits.reshape(-1, num_labels).astype(jnp.float32)
    tgt = targets.reshape(-1)
    valid = tgt != ignore_index
    safe_t = jnp.where(valid, tgt, 0)
    nll = jax.nn.logsumexp(flat, axis=-1) - jnp.take_along_axis(flat, safe_t[:, None], axis=-1)[:, 0]
    loss = jnp.where(valid, nll, 0.0).sum() / jnp.maximum(valid.sum(), 1)
    preds = jnp.argmax(flat, axis=-1)
    correct = jnp.sum((preds == tgt) & valid)
    total = valid.sum()
    return loss, correct, total, outputs


# ----------------------------- pure-JAX reference -----------------------------

def _conv1d_reference(x, w, b):
    """PyTorch-style Conv1d ('same' zero padding) on feature-last x: (B, L, Cin)."""
    K = w.shape[2]
    pad = K // 2
    L = x.shape[1]
    xp = jnp.pad(x, ((0, 0), (pad, pad), (0, 0)))
    out = b[None, None, :].astype(jnp.float32)
    for k in range(K):
        out = out + jnp.einsum("bld,od->blo", xp[:, k:k + L, :], w[:, :, k])
    return out


def convnet_classify_reference(x, bn_gamma, bn_beta, bn_mean, bn_var,
                               v1, g1, b1, v2, g2, b2, eps=1e-5):
    w1 = g1 * v1 / jnp.sqrt(jnp.sum(v1 ** 2))
    w2 = g2 * v2 / jnp.sqrt(jnp.sum(v2 ** 2))
    xn = (x - bn_mean) / jnp.sqrt(bn_var + eps) * bn_gamma + bn_beta
    h = jnp.maximum(_conv1d_reference(xn, w1, b1), 0.0)
    return _conv1d_reference(h, w2, b2)


# ----------------------------- demo -----------------------------

if __name__ == "__main__":
    # Small stand-ins for the module defaults (encoder_embed_dim=512, hid=512, num_classes=3).
    batch, seq = 4, 16
    in_dim, hid_dim, num_labels = 32, 64, 3

    key = jax.random.PRNGKey(0)
    keys = jax.random.split(key, 12)
    x = jax.random.normal(keys[0], (batch, seq, in_dim), jnp.float32)

    bn_gamma = 1.0 + 0.1 * jax.random.normal(keys[1], (in_dim,), jnp.float32)
    bn_beta = 0.1 * jax.random.normal(keys[2], (in_dim,), jnp.float32)
    bn_mean = 0.1 * jax.random.normal(keys[3], (in_dim,), jnp.float32)
    bn_var = 0.5 + jnp.abs(jax.random.normal(keys[4], (in_dim,), jnp.float32))

    v1 = 0.1 * jax.random.normal(keys[5], (hid_dim, in_dim, 5), jnp.float32)      # Conv1d(k=5) V
    g1 = 1.0 + jnp.abs(jax.random.normal(keys[6], (), jnp.float32))
    b1 = 0.01 * jax.random.normal(keys[7], (hid_dim,), jnp.float32)
    v2 = 0.1 * jax.random.normal(keys[8], (num_labels, hid_dim, 3), jnp.float32)  # Conv1d(k=3) V
    g2 = 1.0 + jnp.abs(jax.random.normal(keys[9], (), jnp.float32))
    b2 = 0.01 * jax.random.normal(keys[10], (num_labels,), jnp.float32)

    params = (bn_gamma, bn_beta, bn_mean, bn_var, v1, g1, b1, v2, g2, b2)

    # Auto tile: target_rows/L capped by B=4, then halved to keep 2 grid steps -> bt=2, grid=(2,).
    logits = convnet_classify_pallas(x, *params)
    logits = jax.block_until_ready(logits)
    assert logits.shape == (batch, seq, num_labels)

    ref = convnet_classify_reference(x, *params)
    max_err = float(jnp.max(jnp.abs(logits.astype(jnp.float32) - ref)))
    # bf16 matmul path: tolerance loosened vs the f32 reference (per review guidance).
    assert jnp.allclose(logits.astype(jnp.float32), ref, atol=3e-2, rtol=3e-2), \
        f"max abs err {max_err}"

    # Full head forward: loss / correct / total with label padding (ignore_index) = -1.
    targets = jax.random.randint(keys[11], (batch, seq), 0, num_labels)
    targets = jnp.where(jax.random.uniform(keys[11], (batch, seq)) < 0.15, -1, targets)
    loss, correct, total, _ = sequence_to_sequence_head_forward(
        x, params, targets, ignore_index=-1)
    loss = jax.block_until_ready(loss)
    assert jnp.isfinite(loss)
    assert int(total) >= int(correct) >= 0

    print("KERNEL_OK")
</pallas_src>

<mosaic_0001>
module attributes {stable_mosaic.version = 11 : i64} {
  func.func @_convnet_kernel(%arg0: i32, %arg1: memref<2x16x32xf32, #tpu.memory_space<vmem>>, %arg2: memref<1x32xf32, #tpu.memory_space<vmem>>, %arg3: memref<1x32xf32, #tpu.memory_space<vmem>>, %arg4: memref<5x32x64xbf16, #tpu.memory_space<vmem>>, %arg5: memref<1x64xf32, #tpu.memory_space<vmem>>, %arg6: memref<3x64x128xbf16, #tpu.memory_space<vmem>>, %arg7: memref<1x128xf32, #tpu.memory_space<vmem>>, %arg8: memref<2x16x128xbf16, #tpu.memory_space<vmem>>) attributes {dimension_semantics = [#tpu.dimension_semantics<parallel>], iteration_bounds = array<i64: 2>, scalar_prefetch = 0 : i64, scratch_operands = 0 : i64, tpu.core_type = #tpu.core_type<tc>, window_params = [{transform_indices = @transform_0, window_bounds = array<i64: 2, 16, 32>}, {pipeline_mode = #tpu.pipeline_mode<synchronous>, transform_indices = @transform_1, window_bounds = array<i64: 1, 32>}, {pipeline_mode = #tpu.pipeline_mode<synchronous>, transform_indices = @transform_2, window_bounds = array<i64: 1, 32>}, {pipeline_mode = #tpu.pipeline_mode<synchronous>, transform_indices = @transform_3, window_bounds = array<i64: 5, 32, 64>}, {pipeline_mode = #tpu.pipeline_mode<synchronous>, transform_indices = @transform_4, window_bounds = array<i64: 1, 64>}, {pipeline_mode = #tpu.pipeline_mode<synchronous>, transform_indices = @transform_5, window_bounds = array<i64: 3, 64, 128>}, {pipeline_mode = #tpu.pipeline_mode<synchronous>, transform_indices = @transform_6, window_bounds = array<i64: 1, 128>}, {transform_indices = @transform_7, window_bounds = array<i64: 2, 16, 128>}]} {
    %0 = tpu.iota {dimensions = array<i32: 0>} : vector<32x1xi32>
    %c16_i32 = arith.constant 16 : i32
    %c0_i32 = arith.constant 0 : i32
    %1 = arith.cmpi eq, %c16_i32, %c0_i32 : i32
    %c1_i32 = arith.constant 1 : i32
    %2 = arith.select %1, %c1_i32, %c16_i32 : i32
    %3 = vector.broadcast %2 : i32 to vector<32x1xi32>
    %4 = arith.remsi %0, %3 : vector<32x1xi32>
    %c0_i32_0 = arith.constant 0 : i32
    %5 = vector.broadcast %c0_i32_0 : i32 to vector<32x1xi32>
    %6 = arith.cmpi ne, %4, %5 : vector<32x1xi32>
    %c0_i32_1 = arith.constant 0 : i32
    %7 = vector.broadcast %c0_i32_1 : i32 to vector<32x1xi32>
    %8 = arith.cmpi slt, %4, %7 : vector<32x1xi32>
    %c0_i32_2 = arith.constant 0 : i32
    %9 = arith.cmpi slt, %2, %c0_i32_2 : i32
    %10 = vector.broadcast %9 : i1 to vector<32x1xi1>
    %11 = vector.broadcast %10 : vector<32x1xi1> to vector<32x1xi1>
    %12 = arith.xori %8, %11 : vector<32x1xi1>
    %13 = arith.andi %12, %6 : vector<32x1xi1>
    %14 = vector.broadcast %2 : i32 to vector<32x1xi32>
    %15 = arith.addi %4, %14 : vector<32x1xi32>
    %16 = arith.select %13, %15, %4 : vector<32x1xi1>, vector<32x1xi32>
    %c0 = arith.constant 0 : index
    %c0_3 = arith.constant 0 : index
    %c0_4 = arith.constant 0 : index
    %17 = vector.load %arg1[%c0, %c0_3, %c0_4] : memref<2x16x32xf32, #tpu.memory_space<vmem>>, vector<2x16x32xf32>
    %18 = vector.shape_cast %17 : vector<2x16x32xf32> to vector<32x32xf32>
    %c0_5 = arith.constant 0 : index
    %c0_6 = arith.constant 0 : index
    %19 = vector.load %arg2[%c0_5, %c0_6] : memref<1x32xf32, #tpu.memory_space<vmem>>, vector<1x32xf32>
    %20 = vector.broadcast %19 : vector<1x32xf32> to vector<32x32xf32>
    %21 = arith.mulf %18, %20 : vector<32x32xf32>
    %c0_7 = arith.constant 0 : index
    %c0_8 = arith.constant 0 : index
    %22 = vector.load %arg3[%c0_7, %c0_8] : memref<1x32xf32, #tpu.memory_space<vmem>>, vector<1x32xf32>
    %23 = vector.broadcast %22 : vector<1x32xf32> to vector<32x32xf32>
    %24 = arith.addf %21, %23 : vector<32x32xf32>
    %25 = arith.truncf %24 : vector<32x32xf32> to vector<32x32xbf16>
    %c0_9 = arith.constant 0 : index
    %c0_10 = arith.constant 0 : index
    %c0_11 = arith.constant 0 : index
    %26 = vector.load %arg4[%c0_9, %c0_10, %c0_11] : memref<5x32x64xbf16, #tpu.memory_space<vmem>>, vector<1x32x64xbf16>
    %27 = vector.shape_cast %26 : vector<1x32x64xbf16> to vector<32x64xbf16>
    %cst = arith.constant dense<0.000000e+00> : vector<32x64xf32>
    %28 = tpu.matmul %25, %27, %cst {dimension_numbers = #tpu.dot_dimension_numbers<[1], [0], [0], [1], [0, 0, 1, 1], [], []>} : vector<32x32xbf16>, vector<32x64xbf16>, vector<32x64xf32> -> vector<32x64xf32>
    %c2_i32 = arith.constant 2 : i32
    %29 = tpu.dynamic_rotate %28 by %c2_i32 dim 0 : vector<32x64xf32>, i32 -> vector<32x64xf32>
    %c-2_i32 = arith.constant -2 : i32
    %30 = vector.broadcast %c-2_i32 : i32 to vector<32x1xi32>
    %31 = arith.addi %16, %30 : vector<32x1xi32>
    %c0_i32_12 = arith.constant 0 : i32
    %32 = vector.broadcast %c0_i32_12 : i32 to vector<32x1xi32>
    %33 = arith.cmpi sge, %31, %32 : vector<32x1xi32>
    %c-2_i32_13 = arith.constant -2 : i32
    %34 = vector.broadcast %c-2_i32_13 : i32 to vector<32x1xi32>
    %35 = arith.addi %16, %34 : vector<32x1xi32>
    %c16_i32_14 = arith.constant 16 : i32
    %36 = vector.broadcast %c16_i32_14 : i32 to vector<32x1xi32>
    %37 = arith.cmpi slt, %35, %36 : vector<32x1xi32>
    %38 = arith.andi %33, %37 : vector<32x1xi1>
    %cst_15 = arith.constant 0.000000e+00 : f32
    %39 = vector.shape_cast %38 : vector<32x1xi1> to vector<32x1xi1>
    %40 = vector.broadcast %39 : vector<32x1xi1> to vector<32x64xi1>
    %41 = vector.broadcast %cst_15 : f32 to vector<32x64xf32>
    %42 = arith.select %40, %29, %41 : vector<32x64xi1>, vector<32x64xf32>
    %c1 = arith.constant 1 : index
    %c0_16 = arith.constant 0 : index
    %c0_17 = arith.constant 0 : index
    %43 = vector.load %arg4[%c1, %c0_16, %c0_17] : memref<5x32x64xbf16, #tpu.memory_space<vmem>>, vector<1x32x64xbf16>
    %44 = vector.shape_cast %43 : vector<1x32x64xbf16> to vector<32x64xbf16>
    %cst_18 = arith.constant dense<0.000000e+00> : vector<32x64xf32>
    %45 = tpu.matmul %25, %44, %cst_18 {dimension_numbers = #tpu.dot_dimension_numbers<[1], [0], [0], [1], [0, 0, 1, 1], [], []>} : vector<32x32xbf16>, vector<32x64xbf16>, vector<32x64xf32> -> vector<32x64xf32>
    %c1_i32_19 = arith.constant 1 : i32
    %46 = tpu.dynamic_rotate %45 by %c1_i32_19 dim 0 : vector<32x64xf32>, i32 -> vector<32x64xf32>
    %c-1_i32 = arith.constant -1 : i32
    %47 = vector.broadcast %c-1_i32 : i32 to vector<32x1xi32>
    %48 = arith.addi %16, %47 : vector<32x1xi32>
    %c0_i32_20 = arith.constant 0 : i32
    %49 = vector.broadcast %c0_i32_20 : i32 to vector<32x1xi32>
    %50 = arith.cmpi sge, %48, %49 : vector<32x1xi32>
    %c-1_i32_21 = arith.constant -1 : i32
    %51 = vector.broadcast %c-1_i32_21 : i32 to vector<32x1xi32>
    %52 = arith.addi %16, %51 : vector<32x1xi32>
    %c16_i32_22 = arith.constant 16 : i32
    %53 = vector.broadcast %c16_i32_22 : i32 to vector<32x1xi32>
    %54 = arith.cmpi slt, %52, %53 : vector<32x1xi32>
    %55 = arith.andi %50, %54 : vector<32x1xi1>
    %cst_23 = arith.constant 0.000000e+00 : f32
    %56 = vector.shape_cast %55 : vector<32x1xi1> to vector<32x1xi1>
    %57 = vector.broadcast %56 : vector<32x1xi1> to vector<32x64xi1>
    %58 = vector.broadcast %cst_23 : f32 to vector<32x64xf32>
    %59 = arith.select %57, %46, %58 : vector<32x64xi1>, vector<32x64xf32>
    %60 = arith.addf %42, %59 : vector<32x64xf32>
    %c2 = arith.constant 2 : index
    %c0_24 = arith.constant 0 : index
    %c0_25 = arith.constant 0 : index
    %61 = vector.load %arg4[%c2, %c0_24, %c0_25] : memref<5x32x64xbf16, #tpu.memory_space<vmem>>, vector<1x32x64xbf16>
    %62 = vector.shape_cast %61 : vector<1x32x64xbf16> to vector<32x64xbf16>
    %cst_26 = arith.constant dense<0.000000e+00> : vector<32x64xf32>
    %63 = tpu.matmul %25, %62, %cst_26 {dimension_numbers = #tpu.dot_dimension_numbers<[1], [0], [0], [1], [0, 0, 1, 1], [], []>} : vector<32x32xbf16>, vector<32x64xbf16>, vector<32x64xf32> -> vector<32x64xf32>
    %64 = arith.addf %60, %63 : vector<32x64xf32>
    %c3 = arith.constant 3 : index
    %c0_27 = arith.constant 0 : index
    %c0_28 = arith.constant 0 : index
    %65 = vector.load %arg4[%c3, %c0_27, %c0_28] : memref<5x32x64xbf16, #tpu.memory_space<vmem>>, vector<1x32x64xbf16>
    %66 = vector.shape_cast %65 : vector<1x32x64xbf16> to vector<32x64xbf16>
    %cst_29 = arith.constant dense<0.000000e+00> : vector<32x64xf32>
    %67 = tpu.matmul %25, %66, %cst_29 {dimension_numbers = #tpu.dot_dimension_numbers<[1], [0], [0], [1], [0, 0, 1, 1], [], []>} : vector<32x32xbf16>, vector<32x64xbf16>, vector<32x64xf32> -> vector<32x64xf32>
    %c31_i32 = arith.constant 31 : i32
    %68 = tpu.dynamic_rotate %67 by %c31_i32 dim 0 : vector<32x64xf32>, i32 -> vector<32x64xf32>
    %c1_i32_30 = arith.constant 1 : i32
    %69 = vector.broadcast %c1_i32_30 : i32 to vector<32x1xi32>
    %70 = arith.addi %16, %69 : vector<32x1xi32>
    %c0_i32_31 = arith.constant 0 : i32
    %71 = vector.broadcast %c0_i32_31 : i32 to vector<32x1xi32>
    %72 = arith.cmpi sge, %70, %71 : vector<32x1xi32>
    %c1_i32_32 = arith.constant 1 : i32
    %73 = vector.broadcast %c1_i32_32 : i32 to vector<32x1xi32>
    %74 = arith.addi %16, %73 : vector<32x1xi32>
    %c16_i32_33 = arith.constant 16 : i32
    %75 = vector.broadcast %c16_i32_33 : i32 to vector<32x1xi32>
    %76 = arith.cmpi slt, %74, %75 : vector<32x1xi32>
    %77 = arith.andi %72, %76 : vector<32x1xi1>
    %cst_34 = arith.constant 0.000000e+00 : f32
    %78 = vector.shape_cast %77 : vector<32x1xi1> to vector<32x1xi1>
    %79 = vector.broadcast %78 : vector<32x1xi1> to vector<32x64xi1>
    %80 = vector.broadcast %cst_34 : f32 to vector<32x64xf32>
    %81 = arith.select %79, %68, %80 : vector<32x64xi1>, vector<32x64xf32>
    %82 = arith.addf %64, %81 : vector<32x64xf32>
    %c4 = arith.constant 4 : index
    %c0_35 = arith.constant 0 : index
    %c0_36 = arith.constant 0 : index
    %83 = vector.load %arg4[%c4, %c0_35, %c0_36] : memref<5x32x64xbf16, #tpu.memory_space<vmem>>, vector<1x32x64xbf16>
    %84 = vector.shape_cast %83 : vector<1x32x64xbf16> to vector<32x64xbf16>
    %cst_37 = arith.constant dense<0.000000e+00> : vector<32x64xf32>
    %85 = tpu.matmul %25, %84, %cst_37 {dimension_numbers = #tpu.dot_dimension_numbers<[1], [0], [0], [1], [0, 0, 1, 1], [], []>} : vector<32x32xbf16>, vector<32x64xbf16>, vector<32x64xf32> -> vector<32x64xf32>
    %c30_i32 = arith.constant 30 : i32
    %86 = tpu.dynamic_rotate %85 by %c30_i32 dim 0 : vector<32x64xf32>, i32 -> vector<32x64xf32>
    %c2_i32_38 = arith.constant 2 : i32
    %87 = vector.broadcast %c2_i32_38 : i32 to vector<32x1xi32>
    %88 = arith.addi %16, %87 : vector<32x1xi32>
    %c0_i32_39 = arith.constant 0 : i32
    %89 = vector.broadcast %c0_i32_39 : i32 to vector<32x1xi32>
    %90 = arith.cmpi sge, %88, %89 : vector<32x1xi32>
    %c2_i32_40 = arith.constant 2 : i32
    %91 = vector.broadcast %c2_i32_40 : i32 to vector<32x1xi32>
    %92 = arith.addi %16, %91 : vector<32x1xi32>
    %c16_i32_41 = arith.constant 16 : i32
    %93 = vector.broadcast %c16_i32_41 : i32 to vector<32x1xi32>
    %94 = arith.cmpi slt, %92, %93 : vector<32x1xi32>
    %95 = arith.andi %90, %94 : vector<32x1xi1>
    %cst_42 = arith.constant 0.000000e+00 : f32
    %96 = vector.shape_cast %95 : vector<32x1xi1> to vector<32x1xi1>
    %97 = vector.broadcast %96 : vector<32x1xi1> to vector<32x64xi1>
    %98 = vector.broadcast %cst_42 : f32 to vector<32x64xf32>
    %99 = arith.select %97, %86, %98 : vector<32x64xi1>, vector<32x64xf32>
    %100 = arith.addf %82, %99 : vector<32x64xf32>
    %c0_43 = arith.constant 0 : index
    %c0_44 = arith.constant 0 : index
    %101 = vector.load %arg5[%c0_43, %c0_44] : memref<1x64xf32, #tpu.memory_space<vmem>>, vector<1x64xf32>
    %102 = vector.broadcast %101 : vector<1x64xf32> to vector<32x64xf32>
    %103 = arith.addf %100, %102 : vector<32x64xf32>
    %cst_45 = arith.constant 0.000000e+00 : f32
    %104 = vector.broadcast %cst_45 : f32 to vector<32x64xf32>
    %105 = arith.maximumf %103, %104 : vector<32x64xf32>
    %106 = arith.truncf %105 : vector<32x64xf32> to vector<32x64xbf16>
    %c0_46 = arith.constant 0 : index
    %c0_47 = arith.constant 0 : index
    %c0_48 = arith.constant 0 : index
    %107 = vector.load %arg6[%c0_46, %c0_47, %c0_48] : memref<3x64x128xbf16, #tpu.memory_space<vmem>>, vector<1x64x128xbf16>
    %108 = vector.shape_cast %107 : vector<1x64x128xbf16> to vector<64x128xbf16>
    %cst_49 = arith.constant dense<0.000000e+00> : vector<32x128xf32>
    %109 = tpu.matmul %106, %108, %cst_49 {dimension_numbers = #tpu.dot_dimension_numbers<[1], [0], [0], [1], [0, 0, 1, 1], [], []>} : vector<32x64xbf16>, vector<64x128xbf16>, vector<32x128xf32> -> vector<32x128xf32>
    %c1_i32_50 = arith.constant 1 : i32
    %110 = tpu.dynamic_rotate %109 by %c1_i32_50 dim 0 : vector<32x128xf32>, i32 -> vector<32x128xf32>
    %c-1_i32_51 = arith.constant -1 : i32
    %111 = vector.broadcast %c-1_i32_51 : i32 to vector<32x1xi32>
    %112 = arith.addi %16, %111 : vector<32x1xi32>
    %c0_i32_52 = arith.constant 0 : i32
    %113 = vector.broadcast %c0_i32_52 : i32 to vector<32x1xi32>
    %114 = arith.cmpi sge, %112, %113 : vector<32x1xi32>
    %c-1_i32_53 = arith.constant -1 : i32
    %115 = vector.broadcast %c-1_i32_53 : i32 to vector<32x1xi32>
    %116 = arith.addi %16, %115 : vector<32x1xi32>
    %c16_i32_54 = arith.constant 16 : i32
    %117 = vector.broadcast %c16_i32_54 : i32 to vector<32x1xi32>
    %118 = arith.cmpi slt, %116, %117 : vector<32x1xi32>
    %119 = arith.andi %114, %118 : vector<32x1xi1>
    %cst_55 = arith.constant 0.000000e+00 : f32
    %120 = vector.shape_cast %119 : vector<32x1xi1> to vector<32x1xi1>
    %121 = vector.broadcast %120 : vector<32x1xi1> to vector<32x128xi1>
    %122 = vector.broadcast %cst_55 : f32 to vector<32x128xf32>
    %123 = arith.select %121, %110, %122 : vector<32x128xi1>, vector<32x128xf32>
    %c1_56 = arith.constant 1 : index
    %c0_57 = arith.constant 0 : index
    %c0_58 = arith.constant 0 : index
    %124 = vector.load %arg6[%c1_56, %c0_57, %c0_58] : memref<3x64x128xbf16, #tpu.memory_space<vmem>>, vector<1x64x128xbf16>
    %125 = vector.shape_cast %124 : vector<1x64x128xbf16> to vector<64x128xbf16>
    %cst_59 = arith.constant dense<0.000000e+00> : vector<32x128xf32>
    %126 = tpu.matmul %106, %125, %cst_59 {dimension_numbers = #tpu.dot_dimension_numbers<[1], [0], [0], [1], [0, 0, 1, 1], [], []>} : vector<32x64xbf16>, vector<64x128xbf16>, vector<32x128xf32> -> vector<32x128xf32>
    %127 = arith.addf %123, %126 : vector<32x128xf32>
    %c2_60 = arith.constant 2 : index
    %c0_61 = arith.constant 0 : index
    %c0_62 = arith.constant 0 : index
    %128 = vector.load %arg6[%c2_60, %c0_61, %c0_62] : memref<3x64x128xbf16, #tpu.memory_space<vmem>>, vector<1x64x128xbf16>
    %129 = vector.shape_cast %128 : vector<1x64x128xbf16> to vector<64x128xbf16>
    %cst_63 = arith.constant dense<0.000000e+00> : vector<32x128xf32>
    %130 = tpu.matmul %106, %129, %cst_63 {dimension_numbers = #tpu.dot_dimension_numbers<[1], [0], [0], [1], [0, 0, 1, 1], [], []>} : vector<32x64xbf16>, vector<64x128xbf16>, vector<32x128xf32> -> vector<32x128xf32>
    %c31_i32_64 = arith.constant 31 : i32
    %131 = tpu.dynamic_rotate %130 by %c31_i32_64 dim 0 : vector<32x128xf32>, i32 -> vector<32x128xf32>
    %c1_i32_65 = arith.constant 1 : i32
    %132 = vector.broadcast %c1_i32_65 : i32 to vector<32x1xi32>
    %133 = arith.addi %16, %132 : vector<32x1xi32>
    %c0_i32_66 = arith.constant 0 : i32
    %134 = vector.broadcast %c0_i32_66 : i32 to vector<32x1xi32>
    %135 = arith.cmpi sge, %133, %134 : vector<32x1xi32>
    %c1_i32_67 = arith.constant 1 : i32
    %136 = vector.broadcast %c1_i32_67 : i32 to vector<32x1xi32>
    %137 = arith.addi %16, %136 : vector<32x1xi32>
    %c16_i32_68 = arith.constant 16 : i32
    %138 = vector.broadcast %c16_i32_68 : i32 to vector<32x1xi32>
    %139 = arith.cmpi slt, %137, %138 : vector<32x1xi32>
    %140 = arith.andi %135, %139 : vector<32x1xi1>
    %cst_69 = arith.constant 0.000000e+00 : f32
    %141 = vector.shape_cast %140 : vector<32x1xi1> to vector<32x1xi1>
    %142 = vector.broadcast %141 : vector<32x1xi1> to vector<32x128xi1>
    %143 = vector.broadcast %cst_69 : f32 to vector<32x128xf32>
    %144 = arith.select %142, %131, %143 : vector<32x128xi1>, vector<32x128xf32>
    %145 = arith.addf %127, %144 : vector<32x128xf32>
    %c0_70 = arith.constant 0 : index
    %c0_71 = arith.constant 0 : index
    %146 = vector.load %arg7[%c0_70, %c0_71] : memref<1x128xf32, #tpu.memory_space<vmem>>, vector<1x128xf32>
    %147 = vector.broadcast %146 : vector<1x128xf32> to vector<32x128xf32>
    %148 = arith.addf %145, %147 : vector<32x128xf32>
    %149 = vector.shape_cast %148 : vector<32x128xf32> to vector<2x16x128xf32>
    %150 = arith.truncf %149 : vector<2x16x128xf32> to vector<2x16x128xbf16>
    %c0_72 = arith.constant 0 : index
    %c0_73 = arith.constant 0 : index
    %c0_74 = arith.constant 0 : index
    %151 = vector.load %arg8[%c0_72, %c0_73, %c0_74] : memref<2x16x128xbf16, #tpu.memory_space<vmem>>, vector<2x16x128xbf16>
    tpu.vector_store %arg8[%c0_72, %c0_73, %c0_74], %150 {strides = array<i32>} : memref<2x16x128xbf16, #tpu.memory_space<vmem>>, vector<2x16x128xbf16>,
    return
  }
  func.func @transform_0(%arg0: i32) -> (i32, i32, i32) {
    %c0_i32 = arith.constant 0 : i32
    %c0_i32_0 = arith.constant 0 : i32
    %c0_i32_1 = arith.constant 0 : i32
    return %arg0, %c0_i32, %c0_i32_0 : i32, i32, i32
  }
  func.func @transform_1(%arg0: i32) -> (i32, i32) {
    %c0_i32 = arith.constant 0 : i32
    %c0_i32_0 = arith.constant 0 : i32
    %c0_i32_1 = arith.constant 0 : i32
    return %c0_i32, %c0_i32_0 : i32, i32
  }
  func.func @transform_2(%arg0: i32) -> (i32, i32) {
    %c0_i32 = arith.constant 0 : i32
    %c0_i32_0 = arith.constant 0 : i32
    %c0_i32_1 = arith.constant 0 : i32
    return %c0_i32, %c0_i32_0 : i32, i32
  }
  func.func @transform_3(%arg0: i32) -> (i32, i32, i32) {
    %c0_i32 = arith.constant 0 : i32
    %c0_i32_0 = arith.constant 0 : i32
    %c0_i32_1 = arith.constant 0 : i32
    %c0_i32_2 = arith.constant 0 : i32
    return %c0_i32, %c0_i32_0, %c0_i32_1 : i32, i32, i32
  }
  func.func @transform_4(%arg0: i32) -> (i32, i32) {
    %c0_i32 = arith.constant 0 : i32
    %c0_i32_0 = arith.constant 0 : i32
    %c0_i32_1 = arith.constant 0 : i32
    return %c0_i32, %c0_i32_0 : i32, i32
  }
  func.func @transform_5(%arg0: i32) -> (i32, i32, i32) {
    %c0_i32 = arith.constant 0 : i32
    %c0_i32_0 = arith.constant 0 : i32
    %c0_i32_1 = arith.constant 0 : i32
    %c0_i32_2 = arith.constant 0 : i32
    return %c0_i32, %c0_i32_0, %c0_i32_1 : i32, i32, i32
  }
  func.func @transform_6(%arg0: i32) -> (i32, i32) {
    %c0_i32 = arith.constant 0 : i32
    %c0_i32_0 = arith.constant 0 : i32
    %c0_i32_1 = arith.constant 0 : i32
    return %c0_i32, %c0_i32_0 : i32, i32
  }
  func.func @transform_7(%arg0: i32) -> (i32, i32, i32) {
    %c0_i32 = arith.constant 0 : i32
    %c0_i32_0 = arith.constant 0 : i32
    %c0_i32_1 = arith.constant 0 : i32
    return %arg0, %c0_i32, %c0_i32_0 : i32, i32, i32
  }
}

</mosaic_0001>

<llo_original>
// kernel: tpu_custom_call.1
$region0: #{tpu_custom_call.1}
  #allocation0 [shape = 'u32[]', space=smem, size = 0x4, offset = 0x4, fixed_abs, tag = 'smem constant byte address 0x4 - core index']
  #allocation1 [shape = 'u32[72,128]{1,0:T(1,128)}', space=vmem, size = 0x9000, scoped, tag = 'internal scratch']
  %s0 = inlined_call_operand.hbm [shape: f32[4,16,32], index: 0, kind: input, shape index: {}]
  %s1 = inlined_call_operand.hbm [shape: f32[1,32], index: 1, kind: input, shape index: {}]
  %s2 = inlined_call_operand.vmem [shape: f32[1,32], index: 2, kind: input, shape index: {}]
  %s3 = inlined_call_operand.hbm [shape: bf16[5,32,64], index: 3, kind: input, shape index: {}]
  %s4 = inlined_call_operand.vmem [shape: f32[1,64], index: 4, kind: input, shape index: {}]
  %s5 = inlined_call_operand.hbm [shape: bf16[3,64,128], index: 5, kind: input, shape index: {}]
  %s6 = inlined_call_operand.vmem [shape: f32[1,128], index: 6, kind: input, shape index: {}]
  %s7 = inlined_call_operand.hbm [shape: bf16[4,16,128], index: 7, kind: output, shape index: {}]
  %s8 = sld [smem:[#allocation0]]
  $region77: #{tpu_custom_call.1} parent=0
    _
  %s10 = ssub.s32 1, %s8
  %s11 = scalar_select 0, %s10, %s8
  $region1: #{tpu_custom_call.1} parent=0
    #allocation2 [shape = 'u8[32768]{0}', space=vmem, size = 0x8000, scoped, tag = 'input window, operand 0']
    #allocation3 [shape = 's32[2]{0}', space=sflag, size = 0x8, scoped, tag = 'scoped memory for tpu_custom_call.1']
    #allocation4 [shape = 's32[2]{0}', space=sflag, size = 0x8, scoped, tag = 'scoped memory for tpu_custom_call.1']
    #allocation5 [shape = 'u8[512]{0}', space=vmem, size = 0x400, scoped, tag = 'input window, operand 1, single buffered']
    #allocation6 [shape = 's32[1]{0}', space=sflag, size = 0x4, scoped, tag = 'scoped memory for tpu_custom_call.1']
    #allocation7 [shape = 'u8[40960]{0}', space=vmem, size = 0xa000, scoped, tag = 'input window, operand 3, single buffered']
    #allocation8 [shape = 'u8[49152]{0}', space=vmem, size = 0xc000, scoped, tag = 'input window, operand 5, single buffered']
    #allocation9 [shape = 's32[1]{0}', space=sflag, size = 0x4, scoped, tag = 'scoped memory for tpu_custom_call.1']
    #allocation10 [shape = 'u8[16384]{0}', space=vmem, size = 0x4000, scoped, tag = 'output window, operand 0']
    %12 = vsyncpa [#allocation3], 0
    %s13 = scalar_lea.sflag [#allocation3], 1
    %14 = vsyncpa %s13, 0
    %15 = vsyncpa [#allocation6], 0
    %16 = vsyncpa [#allocation9], 0
    %17 = vsyncpa [#allocation4], 0
    %s18 = scalar_lea.sflag [#allocation4], 1
    %19 = vsyncpa %s18, 0
    loop: start=0, step=1, limit=4
    $region2: #{tpu_custom_call.1} parent=1 // loop_pre_header
      _
    $region3: #{tpu_custom_call.1} parent=1 // loop_header
      %s21 = sphi 0, %s25
      %p22 = scmp.ge.s32.totalorder %s21, 4
      %s31 = sphi 0, %s33
      %s34 = sphi 0, %s31
      %s35 = sphi 0, %s34
      %s51 = sphi 0, %s35
      %s55 = sphi 0, %s55
      %s57 = sphi 0, %s55
      %s58 = sphi 0, %s57
      %s72 = sphi 0, %s58
      %s76 = sphi 0, %s76
      %s78 = sphi 0, %s76
      %s79 = sphi 0, %s78
      %s93 = sphi 0, %s79
      %s97 = sphi 0, %s97
      %s99 = sphi 0, %s97
      %s100 = sphi 0, %s99
      %s114 = sphi 0, %s100
      %s118 = sphi 0, %s118
      %s120 = sphi 0, %s118
      %s121 = sphi 0, %s120
      %s135 = sphi 0, %s121
      %s139 = sphi 0, %s139
      %s141 = sphi 0, %s139
      %s142 = sphi 0, %s141
      %s156 = sphi 0, %s142
      %s160 = sphi 0, %s160
      %s162 = sphi 0, %s160
      %s163 = sphi 0, %s162
      %s177 = sphi 0, %s163
      %s183 = sphi 0, %s185
      %s186 = sphi 0, %s183
      %s187 = sphi 0, %s186
      %s203 = sphi 0, %s187
    $region4: #{tpu_custom_call.1} parent=1 // loop_header_branch
      %24 = sbr.rel (%p22) target = $region8
    $region5: #{tpu_custom_call.1} parent=1 // loop_body
      %s26 = ssub.s32 %s21, 1
      %s27 = ssub.s32 %s21, 2
      %s28 = sadd.s32 %s21, 1
      %s29 = ssub.s32 %s21, %s28
      %p30 = scmp.eq.s32.totalorder %s29, 0
      %s32 = sadd.s32 %s31, 1
      %s33 = scalar_select %p30, %s31, %s32
      %p36 = pneg %p30
      %p37 = scmp.eq.s32.totalorder %s21, 1
      %p38 = por %p36, %p37
      %p39 = scmp.ne.s32.totalorder %s31, %s34
      %p40 = scmp.eq.s32.totalorder %s21, 0
      %p41 = por %p39, %p40
      %p42 = scmp.ne.s32.totalorder %s31, %s34
      %p43 = scmp.eq.s32.totalorder %s26, 1
      %p44 = por %p42, %p43
      %p45 = scmp.ne.s32.totalorder %s34, %s35
      %p46 = scmp.eq.s32.totalorder %s26, 0
      %p47 = por %p45, %p46
      %p48 = scmp.ne.s32.totalorder %s34, %s35
      %p49 = scmp.eq.s32.totalorder %s27, 1
      %p50 = por %p48, %p49
      %p52 = scmp.ne.s32.totalorder %s35, %s51
      %p53 = scmp.eq.s32.totalorder %s27, 0
      %p54 = por %p52, %p53
      %s56 = sadd.s32 %s55, 1
      %p59 = scmp.eq.s32.totalorder %s21, 1
      %p60 = scmp.ne.s32.totalorder %s55, %s57
      %p61 = scmp.eq.s32.totalorder %s21, 0
      %p62 = por %p60, %p61
      %p63 = scmp.ne.s32.totalorder %s55, %s57
      %p64 = scmp.eq.s32.totalorder %s26, 1
      %p65 = por %p63, %p64
      %p66 = scmp.ne.s32.totalorder %s57, %s58
      %p67 = scmp.eq.s32.totalorder %s26, 0
      %p68 = por %p66, %p67
      %p69 = scmp.ne.s32.totalorder %s57, %s58
      %p70 = scmp.eq.s32.totalorder %s27, 1
      %p71 = por %p69, %p70
      %p73 = scmp.ne.s32.totalorder %s58, %s72
      %p74 = scmp.eq.s32.totalorder %s27, 0
      %p75 = por %p73, %p74
      %s77 = sadd.s32 %s76, 1
      %p80 = scmp.eq.s32.totalorder %s21, 1
      %p81 = scmp.ne.s32.totalorder %s76, %s78
      %p82 = scmp.eq.s32.totalorder %s21, 0
      %p83 = por %p81, %p82
      %p84 = scmp.ne.s32.totalorder %s76, %s78
      %p85 = scmp.eq.s32.totalorder %s26, 1
      %p86 = por %p84, %p85
      %p87 = scmp.ne.s32.totalorder %s78, %s79
      %p88 = scmp.eq.s32.totalorder %s26, 0
      %p89 = por %p87, %p88
      %p90 = scmp.ne.s32.totalorder %s78, %s79
      %p91 = scmp.eq.s32.totalorder %s27, 1
      %p92 = por %p90, %p91
      %p94 = scmp.ne.s32.totalorder %s79, %s93
      %p95 = scmp.eq.s32.totalorder %s27, 0
      %p96 = por %p94, %p95
      %s98 = sadd.s32 %s97, 1
      %p101 = scmp.eq.s32.totalorder %s21, 1
      %p102 = scmp.ne.s32.totalorder %s97, %s99
      %p103 = scmp.eq.s32.totalorder %s21, 0
      %p104 = por %p102, %p103
      %p105 = scmp.ne.s32.totalorder %s97, %s99
      %p106 = scmp.eq.s32.totalorder %s26, 1
      %p107 = por %p105, %p106
      %p108 = scmp.ne.s32.totalorder %s99, %s100
      %p109 = scmp.eq.s32.totalorder %s26, 0
      %p110 = por %p108, %p109
      %p111 = scmp.ne.s32.totalorder %s99, %s100
      %p112 = scmp.eq.s32.totalorder %s27, 1
      %p113 = por %p111, %p112
      %p115 = scmp.ne.s32.totalorder %s100, %s114
      %p116 = scmp.eq.s32.totalorder %s27, 0
      %p117 = por %p115, %p116
      %s119 = sadd.s32 %s118, 1
      %p122 = scmp.eq.s32.totalorder %s21, 1
      %p123 = scmp.ne.s32.totalorder %s118, %s120
      %p124 = scmp.eq.s32.totalorder %s21, 0
      %p125 = por %p123, %p124
      %p126 = scmp.ne.s32.totalorder %s118, %s120
      %p127 = scmp.eq.s32.totalorder %s26, 1
      %p128 = por %p126, %p127
      %p129 = scmp.ne.s32.totalorder %s120, %s121
      %p130 = scmp.eq.s32.totalorder %s26, 0
      %p131 = por %p129, %p130
      %p132 = scmp.ne.s32.totalorder %s120, %s121
      %p133 = scmp.eq.s32.totalorder %s27, 1
      %p134 = por %p132, %p133
      %p136 = scmp.ne.s32.totalorder %s121, %s135
      %p137 = scmp.eq.s32.totalorder %s27, 0
      %p138 = por %p136, %p137
      %s140 = sadd.s32 %s139, 1
      %p143 = scmp.eq.s32.totalorder %s21, 1
      %p144 = scmp.ne.s32.totalorder %s139, %s141
      %p145 = scmp.eq.s32.totalorder %s21, 0
      %p146 = por %p144, %p145
      %p147 = scmp.ne.s32.totalorder %s139, %s141
      %p148 = scmp.eq.s32.totalorder %s26, 1
      %p149 = por %p147, %p148
      %p150 = scmp.ne.s32.totalorder %s141, %s142
      %p151 = scmp.eq.s32.totalorder %s26, 0
      %p152 = por %p150, %p151
      %p153 = scmp.ne.s32.totalorder %s141, %s142
      %p154 = scmp.eq.s32.totalorder %s27, 1
      %p155 = por %p153, %p154
      %p157 = scmp.ne.s32.totalorder %s142, %s156
      %p158 = scmp.eq.s32.totalorder %s27, 0
      %p159 = por %p157, %p158
      %s161 = sadd.s32 %s160, 1
      %p164 = scmp.eq.s32.totalorder %s21, 1
      %p165 = scmp.ne.s32.totalorder %s160, %s162
      %p166 = scmp.eq.s32.totalorder %s21, 0
      %p167 = por %p165, %p166
      %p168 = scmp.ne.s32.totalorder %s160, %s162
      %p169 = scmp.eq.s32.totalorder %s26, 1
      %p170 = por %p168, %p169
      %p171 = scmp.ne.s32.totalorder %s162, %s163
      %p172 = scmp.eq.s32.totalorder %s26, 0
      %p173 = por %p171, %p172
      %p174 = scmp.ne.s32.totalorder %s162, %s163
      %p175 = scmp.eq.s32.totalorder %s27, 1
      %p176 = por %p174, %p175
      %p178 = scmp.ne.s32.totalorder %s163, %s177
      %p179 = scmp.eq.s32.totalorder %s27, 0
      %p180 = por %p178, %p179
      %s181 = ssub.s32 %s21, %s28
      %p182 = scmp.eq.s32.totalorder %s181, 0
      %s184 = sadd.s32 %s183, 1
      %s185 = scalar_select %p182, %s183, %s184
      %p188 = pneg %p182
      %p189 = scmp.eq.s32.totalorder %s21, 1
      %p190 = por %p188, %p189
      %p191 = scmp.ne.s32.totalorder %s183, %s186
      %p192 = scmp.eq.s32.totalorder %s21, 0
      %p193 = por %p191, %p192
      %p194 = scmp.ne.s32.totalorder %s183, %s186
      %p195 = scmp.eq.s32.totalorder %s26, 1
      %p196 = por %p194, %p195
      %p197 = scmp.ne.s32.totalorder %s186, %s187
      %p198 = scmp.eq.s32.totalorder %s26, 0
      %p199 = por %p197, %p198
      %p200 = scmp.ne.s32.totalorder %s186, %s187
      %p201 = scmp.eq.s32.totalorder %s27, 1
      %p202 = por %p200, %p201
      %p204 = scmp.ne.s32.totalorder %s187, %s203
      %p205 = scmp.eq.s32.totalorder %s27, 0
      %p206 = por %p204, %p205
      %p207 = scmp.le.s32.totalorder 1, %s21
      %p208 = scmp.lt.s32.totalorder %s21, 3
      %p209 = pnand %p207, %p208
      %p210 = pneg %p209
      // Predicated region
      $region9: #{tpu_custom_call.1} parent=5 // pred_check
        _
      $region10: #{tpu_custom_call.1} parent=5 // pred_check_branch
        %212 = sbr.rel (%p209) target = $region12
      $region11: #{tpu_custom_call.1} parent=5 // pred_region
        %s213 = ssub.s32 %s21, 1
        // Predicated region
        $region13: #{tpu_custom_call.1} parent=11 // pred_check
          %p214 = pneg %p68
        $region14: #{tpu_custom_call.1} parent=11 // pred_check_branch
          %216 = sbr.rel (%p214) target = $region16
        $region15: #{tpu_custom_call.1} parent=11 // pred_region
          %218 = vsyncadd [#allocation6], 0
          %s220 = sshll.u32 %s1, 4
          %s221 = int_to_ptr.hbm [resolvable:$true] %s220
          %s222 = sshll.u32 [#allocation5], 4
          %s223 = int_to_ptr.vmem [resolvable:$true] %s222
          %225 = dma.hbm_to_vmem [thread:$0]  %s221, 16, %s223, [#allocation6]
        $region16: #{tpu_custom_call.1} parent=11 // pred_fallthru
          _
        // Predicated region
        $region17: #{tpu_custom_call.1} parent=11 // pred_check
          %p226 = pneg %p89
        $region18: #{tpu_custom_call.1} parent=11 // pred_check_branch
          %228 = sbr.rel (%p226) target = $region20
        $region19: #{tpu_custom_call.1} parent=11 // pred_region
          _
        $region20: #{tpu_custom_call.1} parent=11 // pred_fallthru
          _
        // Predicated region
        $region21: #{tpu_custom_call.1} parent=11 // pred_check
          %p229 = pneg %p110
        $region22: #{tpu_custom_call.1} parent=11 // pred_check_branch
          %231 = sbr.rel (%p229) target = $region24
        $region23: #{tpu_custom_call.1} parent=11 // pred_region
          %233 = vsyncadd [#allocation6], 0
          %s234 = sshll.u32 %s3, 4
          %s235 = int_to_ptr.hbm [resolvable:$true] %s234
          %s236 = sshll.u32 [#allocation7], 4
          %s237 = int_to_ptr.vmem [resolvable:$true] %s236
          %242 = dma.hbm_to_vmem [thread:$0]  %s235, 1280, %s237, [#allocation6], 64, 64, 4
        $region24: #{tpu_custom_call.1} parent=11 // pred_fallthru
          _
        // Predicated region
        $region25: #{tpu_custom_call.1} parent=11 // pred_check
          %p243 = pneg %p131
        $region26: #{tpu_custom_call.1} parent=11 // pred_check_branch
          %245 = sbr.rel (%p243) target = $region28
        $region27: #{tpu_custom_call.1} parent=11 // pred_region
          _
        $region28: #{tpu_custom_call.1} parent=11 // pred_fallthru
          _
        // Predicated region
        $region29: #{tpu_custom_call.1} parent=11 // pred_check
          %p246 = pneg %p152
        $region30: #{tpu_custom_call.1} parent=11 // pred_check_branch
          %248 = sbr.rel (%p246) target = $region32
        $region31: #{tpu_custom_call.1} parent=11 // pred_region
          %250 = vsyncadd [#allocation9], 0
          %s251 = sshll.u32 %s5, 4
          %s252 = int_to_ptr.hbm [resolvable:$true] %s251
          %s253 = sshll.u32 [#allocation8], 4
          %s254 = int_to_ptr.vmem [resolvable:$true] %s253
          %259 = dma.hbm_to_vmem [thread:$0]  %s252, 1536, %s254, [#allocation9], 64, 64, 4
        $region32: #{tpu_custom_call.1} parent=11 // pred_fallthru
          _
        // Predicated region
        $region33: #{tpu_custom_call.1} parent=11 // pred_check
          %p260 = pneg %p173
        $region34: #{tpu_custom_call.1} parent=11 // pred_check_branch
          %262 = sbr.rel (%p260) target = $region36
        $region35: #{tpu_custom_call.1} parent=11 // pred_region
          _
        $region36: #{tpu_custom_call.1} parent=11 // pred_fallthru
          _
      $region12: #{tpu_custom_call.1} parent=5 // pred_fallthru
        _
      %p263 = scmp.lt.s32.totalorder %s21, 2
      // Predicated region
      $region37: #{tpu_custom_call.1} parent=5 // pred_check
        %p264 = pneg %p263
      $region38: #{tpu_custom_call.1} parent=5 // pred_check_branch
        %266 = sbr.rel (%p264) target = $region40
      $region39: #{tpu_custom_call.1} parent=5 // pred_region
        // Predicated region
        $region41: #{tpu_custom_call.1} parent=39 // pred_check
          %p267 = pneg %p41
        $region42: #{tpu_custom_call.1} parent=39 // pred_check_branch
          %269 = sbr.rel (%p267) target = $region44
        $region43: #{tpu_custom_call.1} parent=39 // pred_region
          %s270 = sand.u32 %s31, 1
          %s271 = scalar_lea.sflag [#allocation3], %s270
          %s272 = sand.u32 %s31, 1
          %s273 = smul.addr %s272, 32
          %s274 = scalar_lea.vmem [#allocation2], %s273
          %s275 = smul.u32 2, %s21
          %277 = vsyncadd %s271, 0
          %s278 = smul.addr %s275, 2
          %s279 = smul.addr %s278, 8
          %s280 = scalar_lea.hbm %s0, %s279
          %s281 = sshll.u32 %s280, 4
          %s282 = int_to_ptr.hbm [resolvable:$true] %s281
          %s283 = sshll.u32 %s274, 4
          %s284 = int_to_ptr.vmem [resolvable:$true] %s283
          %289 = dma.hbm_to_vmem [thread:$0]  %s282, 512, %s284, %s271, 128, 128, 8
        $region44: #{tpu_custom_call.1} parent=39 // pred_fallthru
          _
      $region40: #{tpu_custom_call.1} parent=5 // pred_fallthru
        _
      %p290 = scmp.le.s32.totalorder 1, %s21
      %p291 = scmp.lt.s32.totalorder %s21, 3
      %p292 = pnand %p290, %p291
      %p293 = pneg %p292
      // Predicated region
      $region45: #{tpu_custom_call.1} parent=5 // pred_check
        _
      $region46: #{tpu_custom_call.1} parent=5 // pred_check_branch
        %295 = sbr.rel (%p292) target = $region48
      $region47: #{tpu_custom_call.1} parent=5 // pred_region
        %s296 = ssub.s32 %s21, 1
        %s297 = sand.u32 %s34, 1
        %s298 = scalar_lea.sflag [#allocation3], %s297
        %s299 = sand.u32 %s34, 1
        %s300 = smul.addr %s299, 32
        %s301 = scalar_lea.vmem [#allocation2], %s300
        // Predicated region
        $region49: #{tpu_custom_call.1} parent=47 // pred_check
          %p302 = pneg %p47
        $region50: #{tpu_custom_call.1} parent=47 // pred_check_branch
          %304 = sbr.rel (%p302) target = $region52
        $region51: #{tpu_custom_call.1} parent=47 // pred_region
          %306 = dma.done %s298, 512
        $region52: #{tpu_custom_call.1} parent=47 // pred_fallthru
          _
        // Predicated region
        $region53: #{tpu_custom_call.1} parent=47 // pred_check
          %p307 = pneg %p68
        $region54: #{tpu_custom_call.1} parent=47 // pred_check_branch
          %309 = sbr.rel (%p307) target = $region56
        $region55: #{tpu_custom_call.1} parent=47 // pred_region
          %311 = dma.done [#allocation6], 16
        $region56: #{tpu_custom_call.1} parent=47 // pred_fallthru
          _
        // Predicated region
        $region57: #{tpu_custom_call.1} parent=47 // pred_check
          %p312 = pneg %p110
        $region58: #{tpu_custom_call.1} parent=47 // pred_check_branch
          %314 = sbr.rel (%p312) target = $region60
        $region59: #{tpu_custom_call.1} parent=47 // pred_region
          %316 = dma.done [#allocation6], 1280
        $region60: #{tpu_custom_call.1} parent=47 // pred_fallthru
          _
        // Predicated region
        $region61: #{tpu_custom_call.1} parent=47 // pred_check
          %p317 = pneg %p152
        $region62: #{tpu_custom_call.1} parent=47 // pred_check_branch
          %319 = sbr.rel (%p317) target = $region64
        $region63: #{tpu_custom_call.1} parent=47 // pred_region
          %321 = dma.done [#allocation9], 1536
        $region64: #{tpu_custom_call.1} parent=47 // pred_fallthru
          _
        %s322 = sand.u32 %s34, 1
        %s323 = scalar_lea.sflag [#allocation3], %s322
        %s324 = sand.u32 %s34, 1
        %s325 = smul.addr %s324, 32
        %s326 = scalar_lea.vmem [#allocation2], %s325
        %p327 = pneg %p47
        %p328 = pneg %p44
        %p329 = pneg %p68
        %p330 = pneg %p65
        %p331 = pneg %p89
        %p332 = pneg %p86
        %p333 = pneg %p110
        %p334 = pneg %p107
        %p335 = pneg %p131
        %p336 = pneg %p128
        %p337 = pneg %p152
        %p338 = pneg %p149
        %p339 = pneg %p173
        %p340 = pneg %p170
        %p341 = pneg %p199
        %p342 = pneg %p196
        %s343 = sand.u32 %s186, 1
        %s344 = scalar_lea.sflag [#allocation4], %s343
        %s345 = sand.u32 %s186, 1
        %s346 = smul.addr %s345, 16
        %s347 = scalar_lea.vmem [#allocation10], %s346
        %s348 = smul.u32 2, %s26
        %s349 = smul.u32 2, %s26
        %v351 = vlaneseq
        %v352 = vshrl.u32 %v351, 7
        %v353 = vadd.s32 %v352, 8
        %v354 = vadd.s32 %v352, 16
        %v355 = vadd.s32 %v352, 24
        %vm356 = vcmp.lt.s32.totalorder %v352, 0
        %v357 = vsub.s32 0, %v352
        %v358 = vsel %vm356, %v357, %v352
        %v359 = vshrl.u32 %v358, 4
        %v360 = vand.u32 %v358, 15
        %v361 = vsub.s32 0, %v360
        %v362 = vsel %vm356, %v361, %v360
        %vm363 = vcmp.lt.s32.totalorder %v353, 0
        %v364 = vsub.s32 0, %v353
        %v365 = vsel %vm363, %v364, %v353
        %v366 = vshrl.u32 %v365, 4
        %v367 = vand.u32 %v365, 15
        %v368 = vsub.s32 0, %v367
        %v369 = vsel %vm363, %v368, %v367
        %vm370 = vcmp.lt.s32.totalorder %v354, 0
        %v371 = vsub.s32 0, %v354
        %v372 = vsel %vm370, %v371, %v354
        %v373 = vshrl.u32 %v372, 4
        %v374 = vand.u32 %v372, 15
        %v375 = vsub.s32 0, %v374
        %v376 = vsel %vm370, %v375, %v374
        %vm377 = vcmp.lt.s32.totalorder %v355, 0
        %v378 = vsub.s32 0, %v355
        %v379 = vsel %vm377, %v378, %v355
        %v380 = vshrl.u32 %v379, 4
        %v381 = vand.u32 %v379, 15
        %v382 = vsub.s32 0, %v381
        %v383 = vsel %vm377, %v382, %v381
        %vm384 = vcmp.ne.s32.totalorder %v362, 0
        %vm385 = vcmp.ne.s32.totalorder %v369, 0
        %vm386 = vcmp.ne.s32.totalorder %v376, 0
        %vm387 = vcmp.ne.s32.totalorder %v383, 0
        %vm388 = vcmp.lt.s32.totalorder %v362, 0
        %vm389 = vcmp.lt.s32.totalorder %v369, 0
        %vm390 = vcmp.lt.s32.totalorder %v376, 0
        %vm391 = vcmp.lt.s32.totalorder %v383, 0
        %vm392 = vmand %vm388, %vm384
        %vm393 = vmand %vm389, %vm385
        %vm394 = vmand %vm390, %vm386
        %vm395 = vmand %vm391, %vm387
        %v396 = vadd.s32 %v362, 16
        %v397 = vadd.s32 %v369, 16
        %v398 = vadd.s32 %v376, 16
        %v399 = vadd.s32 %v383, 16
        %v400 = vsel %vm392, %v396, %v362
        %v401 = vsel %vm393, %v397, %v369
        %v402 = vsel %vm394, %v398, %v376
        %v403 = vsel %vm395, %v399, %v383
        %v404 = vld [vmem:[%s301] sm:$0xff]
        %v405 = vld [vmem:[%s301 + $0x8] sm:$0xff]
        %v406 = vld [vmem:[%s301 + $0x10] sm:$0xff]
        %v407 = vld [vmem:[%s301 + $0x18] sm:$0xff]
        %v408 = vld [vmem:[#allocation5] sm:$0x1]
        %v410 = vperm.slane %v408, 0
        %v412 = vmul.f32 %v404, %v410
        %v413 = vmul.f32 %v405, %v410
        %v414 = vmul.f32 %v406, %v410
        %v415 = vmul.f32 %v407, %v410
        %v416 = vld [vmem:[%s2] sm:$0x1]
        %v418 = vperm.slane %v416, 0
        %v420 = vadd.f32 %v412, %v418
        %v421 = vadd.f32 %v413, %v418
        %v422 = vadd.f32 %v414, %v418
        %v423 = vadd.f32 %v415, %v418
        %v424 = vpack.c.bf16 %v421, %v420
        %v425 = vpack.c.bf16 %v423, %v422
        %v426 = vld [vmem:[#allocation7] sm:$0xf]
        %v427 = vld [vmem:[#allocation7 + $0x4] sm:$0xf]
        %v428 = vld [vmem:[#allocation7 + $0x8] sm:$0xf]
        %v429 = vld [vmem:[#allocation7 + $0xc] sm:$0xf]
        %v434 = vunpack.c.l.b16 %v426
        %v435 = vunpack.c.l.b16 %v427
        %v436 = vunpack.c.l.b16 %v428
        %v437 = vunpack.c.l.b16 %v429
        %v438 = vpack.c.b16 %v435, %v434
        %v439 = vpack.c.b16 %v437, %v436
        %vm442 = vcmask 261120
        %v444 = vsel %vm442, %v424, 0
        %v447 = vsel %vm442, %v425, 0
        %449 = vmatpush.bf16.msra.mxu0 0
        %450 = vmatpush.bf16.msra.mxu0 0
        %451 = vmatpush.bf16.msra.mxu0 0
        %452 = vmatpush.bf16.msra.mxu0 0
        %453 = vmatpush.bf16.msra.mxu0 0
        %454 = vmatpush.bf16.msra.mxu0 0
        %455 = vmatpush.bf16.msra.mxu0 %v439
        %456 = vmatpush.bf16.msra.mxu0 %v438
        %457 = vmatmul.bf16.gmra.mxu0 %v444
        %v458 = vpop.f32.mrf.mxu0
        %v459 = vadd.f32 0.0, %v458
        %v460 = vpop.f32.mrf.mxu0
        %v461 = vadd.f32 0.0, %v460
        %462 = vmatmul.bf16.gmra.mxu0 %v447
        %v463 = vpop.f32.mrf.mxu0
        %v464 = vadd.f32 0.0, %v463
        %v465 = vpop.f32.mrf.mxu0
        %v466 = vadd.f32 0.0, %v465
        %467 = vdwg.mxu0
        %v468 = vrot.slane %v459, 6
        %v469 = vrot.slane %v461, 6
        %v470 = vrot.slane %v464, 6
        %v471 = vrot.slane %v466, 6
        %vm472 = vcmp.lt.s32.totalorder %v352, 2
        %v473 = vsel %vm472, %v470, %v471
        %v474 = vsel %vm472, %v469, %v470
        %v475 = vsel %vm472, %v468, %v469
        %v476 = vsel %vm472, %v471, %v468
        %v477 = vadd.s32 %v400, 4294967294
        %v478 = vadd.s32 %v401, 4294967294
        %v479 = vadd.s32 %v402, 4294967294
        %v480 = vadd.s32 %v403, 4294967294
        %vm481 = vcmp.ge.s32.totalorder %v477, 0
        %vm482 = vcmp.ge.s32.totalorder %v478, 0
        %vm483 = vcmp.ge.s32.totalorder %v479, 0
        %vm484 = vcmp.ge.s32.totalorder %v480, 0
        %vm485 = vcmp.lt.s32.totalorder %v477, 16
        %vm486 = vcmp.lt.s32.totalorder %v478, 16
        %vm487 = vcmp.lt.s32.totalorder %v479, 16
        %vm488 = vcmp.lt.s32.totalorder %v480, 16
        %vm489 = vmand %vm481, %vm485
        %vm490 = vmand %vm482, %vm486
        %vm491 = vmand %vm483, %vm487
        %vm492 = vmand %vm484, %vm488
        %v493 = vsel %vm489, 1, 0
        %v494 = vsel %vm490, 1, 0
        %v495 = vsel %vm491, 1, 0
        %v496 = vsel %vm492, 1, 0
        %vm497 = vcmp.eq.s32.totalorder %v493, 1
        %vm498 = vcmp.eq.s32.totalorder %v494, 1
        %vm499 = vcmp.eq.s32.totalorder %v495, 1
        %vm500 = vcmp.eq.s32.totalorder %v496, 1
        %v501 = vsel %vm497, %v476, 0.0
        %v502 = vsel %vm498, %v475, 0.0
        %v503 = vsel %vm499, %v474, 0.0
        %v504 = vsel %vm500, %v473, 0.0
        %s505 = scalar_lea.vmem [#allocation7], 16
        %v506 = vld [vmem:[%s505] sm:$0xf]
        %v507 = vld [vmem:[%s505 + $0x4] sm:$0xf]
        %v508 = vld [vmem:[%s505 + $0x8] sm:$0xf]
        %v509 = vld [vmem:[%s505 + $0xc] sm:$0xf]
        %v514 = vunpack.c.l.b16 %v506
        %v515 = vunpack.c.l.b16 %v507
        %v516 = vunpack.c.l.b16 %v508
        %v517 = vunpack.c.l.b16 %v509
        %v518 = vpack.c.b16 %v515, %v514
        %v519 = vpack.c.b16 %v517, %v516
        %522 = vmatpush.bf16.msra.mxu0 0
        %523 = vmatpush.bf16.msra.mxu0 0
        %524 = vmatpush.bf16.msra.mxu0 0
        %525 = vmatpush.bf16.msra.mxu0 0
        %526 = vmatpush.bf16.msra.mxu0 0
        %527 = vmatpush.bf16.msra.mxu0 0
        %528 = vmatpush.bf16.msra.mxu0 %v519
        %529 = vmatpush.bf16.msra.mxu0 %v518
        %530 = vmatmul.bf16.gmra.mxu0 %v444
        %v531 = vpop.f32.mrf.mxu0
        %v532 = vadd.f32 0.0, %v531
        %v533 = vpop.f32.mrf.mxu0
        %v534 = vadd.f32 0.0, %v533
        %535 = vmatmul.bf16.gmra.mxu0 %v447
        %v536 = vpop.f32.mrf.mxu0
        %v537 = vadd.f32 0.0, %v536
        %v538 = vpop.f32.mrf.mxu0
        %v539 = vadd.f32 0.0, %v538
        %540 = vdwg.mxu0
        %v541 = vrot.slane %v532, 7
        %v542 = vrot.slane %v534, 7
        %v543 = vrot.slane %v537, 7
        %v544 = vrot.slane %v539, 7
        %vm545 = vcmp.lt.s32.totalorder %v352, 1
        %v546 = vsel %vm545, %v543, %v544
        %v547 = vsel %vm545, %v542, %v543
        %v548 = vsel %vm545, %v541, %v542
        %v549 = vsel %vm545, %v544, %v541
        %v550 = vadd.s32 %v400, 4294967295
        %v551 = vadd.s32 %v401, 4294967295
        %v552 = vadd.s32 %v402, 4294967295
        %v553 = vadd.s32 %v403, 4294967295
        %vm554 = vcmp.ge.s32.totalorder %v550, 0
        %vm555 = vcmp.ge.s32.totalorder %v551, 0
        %vm556 = vcmp.ge.s32.totalorder %v552, 0
        %vm557 = vcmp.ge.s32.totalorder %v553, 0
        %vm558 = vcmp.lt.s32.totalorder %v550, 16
        %vm559 = vcmp.lt.s32.totalorder %v551, 16
        %vm560 = vcmp.lt.s32.totalorder %v552, 16
        %vm561 = vcmp.lt.s32.totalorder %v553, 16
        %vm562 = vmand %vm554, %vm558
        %vm563 = vmand %vm555, %vm559
        %vm564 = vmand %vm556, %vm560
        %vm565 = vmand %vm557, %vm561
        %v566 = vsel %vm562, 1, 0
        %v567 = vsel %vm563, 1, 0
        %v568 = vsel %vm564, 1, 0
        %v569 = vsel %vm565, 1, 0
        %vm570 = vcmp.eq.s32.totalorder %v566, 1
        %vm571 = vcmp.eq.s32.totalorder %v567, 1
        %vm572 = vcmp.eq.s32.totalorder %v568, 1
        %vm573 = vcmp.eq.s32.totalorder %v569, 1
        %v574 = vsel %vm570, %v549, 0.0
        %v575 = vsel %vm571, %v548, 0.0
        %v576 = vsel %vm572, %v547, 0.0
        %v577 = vsel %vm573, %v546, 0.0
        %v578 = vadd.f32 %v501, %v574
        %v579 = vadd.f32 %v502, %v575
        %v580 = vadd.f32 %v503, %v576
        %v581 = vadd.f32 %v504, %v577
        %s582 = scalar_lea.vmem [#allocation7], 32
        %v583 = vld [vmem:[%s582] sm:$0xf]
        %v584 = vld [vmem:[%s582 + $0x4] sm:$0xf]
        %v585 = vld [vmem:[%s582 + $0x8] sm:$0xf]
        %v586 = vld [vmem:[%s582 + $0xc] sm:$0xf]
        %v591 = vunpack.c.l.b16 %v583
        %v592 = vunpack.c.l.b16 %v584
        %v593 = vunpack.c.l.b16 %v585
        %v594 = vunpack.c.l.b16 %v586
        %v595 = vpack.c.b16 %v592, %v591
        %v596 = vpack.c.b16 %v594, %v593
        %599 = vmatpush.bf16.msra.mxu0 0
        %600 = vmatpush.bf16.msra.mxu0 0
        %601 = vmatpush.bf16.msra.mxu0 0
        %602 = vmatpush.bf16.msra.mxu0 0
        %603 = vmatpush.bf16.msra.mxu0 0
        %604 = vmatpush.bf16.msra.mxu0 0
        %605 = vmatpush.bf16.msra.mxu0 %v596
        %606 = vmatpush.bf16.msra.mxu0 %v595
        %607 = vmatmul.bf16.gmra.mxu0 %v444
        %v608 = vpop.f32.mrf.mxu0
        %v609 = vadd.f32 0.0, %v608
        %v610 = vpop.f32.mrf.mxu0
        %v611 = vadd.f32 0.0, %v610
        %612 = vmatmul.bf16.gmra.mxu0 %v447
        %v613 = vpop.f32.mrf.mxu0
        %v614 = vadd.f32 0.0, %v613
        %v615 = vpop.f32.mrf.mxu0
        %v616 = vadd.f32 0.0, %v615
        %617 = vdwg.mxu0
        %v618 = vadd.f32 %v578, %v609
        %v619 = vadd.f32 %v579, %v611
        %v620 = vadd.f32 %v580, %v614
        %v621 = vadd.f32 %v581, %v616
        %s622 = scalar_lea.vmem [#allocation7], 48
        %v623 = vld [vmem:[%s622] sm:$0xf]
        %v624 = vld [vmem:[%s622 + $0x4] sm:$0xf]
        %v625 = vld [vmem:[%s622 + $0x8] sm:$0xf]
        %v626 = vld [vmem:[%s622 + $0xc] sm:$0xf]
        %v631 = vunpack.c.l.b16 %v623
        %v632 = vunpack.c.l.b16 %v624
        %v633 = vunpack.c.l.b16 %v625
        %v634 = vunpack.c.l.b16 %v626
        %v635 = vpack.c.b16 %v632, %v631
        %v636 = vpack.c.b16 %v634, %v633
        %639 = vmatpush.bf16.msra.mxu0 0
        %640 = vmatpush.bf16.msra.mxu0 0
        %641 = vmatpush.bf16.msra.mxu0 0
        %642 = vmatpush.bf16.msra.mxu0 0
        %643 = vmatpush.bf16.msra.mxu0 0
        %644 = vmatpush.bf16.msra.mxu0 0
        %645 = vmatpush.bf16.msra.mxu0 %v636
        %646 = vmatpush.bf16.msra.mxu0 %v635
        %647 = vmatmul.bf16.gmra.mxu0 %v444
        %v648 = vpop.f32.mrf.mxu0
        %v649 = vadd.f32 0.0, %v648
        %v650 = vpop.f32.mrf.mxu0
        %v651 = vadd.f32 0.0, %v650
        %652 = vmatmul.bf16.gmra.mxu0 %v447
        %v653 = vpop.f32.mrf.mxu0
        %v654 = vadd.f32 0.0, %v653
        %v655 = vpop.f32.mrf.mxu0
        %v656 = vadd.f32 0.0, %v655
        %657 = vdwg.mxu0
        %v658 = vrot.slane %v649, 1
        %v659 = vrot.slane %v651, 1
        %v660 = vrot.slane %v654, 1
        %v661 = vrot.slane %v656, 1
        %vm662 = vcmp.lt.s32.totalorder %v352, 7
        %v663 = vsel %vm662, %v660, %v661
        %v664 = vsel %vm662, %v659, %v660
        %v665 = vsel %vm662, %v658, %v659
        %v666 = vsel %vm662, %v661, %v658
        %v667 = vadd.s32 %v400, 1
        %v668 = vadd.s32 %v401, 1
        %v669 = vadd.s32 %v402, 1
        %v670 = vadd.s32 %v403, 1
        %vm671 = vcmp.ge.s32.totalorder %v667, 0
        %vm672 = vcmp.ge.s32.totalorder %v668, 0
        %vm673 = vcmp.ge.s32.totalorder %v669, 0
        %vm674 = vcmp.ge.s32.totalorder %v670, 0
        %vm675 = vcmp.lt.s32.totalorder %v667, 16
        %vm676 = vcmp.lt.s32.totalorder %v668, 16
        %vm677 = vcmp.lt.s32.totalorder %v669, 16
        %vm678 = vcmp.lt.s32.totalorder %v670, 16
        %vm679 = vmand %vm671, %vm675
        %vm680 = vmand %vm672, %vm676
        %vm681 = vmand %vm673, %vm677
        %vm682 = vmand %vm674, %vm678
        %v683 = vsel %vm679, 1, 0
        %v684 = vsel %vm680, 1, 0
        %v685 = vsel %vm681, 1, 0
        %v686 = vsel %vm682, 1, 0
        %vm687 = vcmp.eq.s32.totalorder %v683, 1
        %vm688 = vcmp.eq.s32.totalorder %v684, 1
        %vm689 = vcmp.eq.s32.totalorder %v685, 1
        %vm690 = vcmp.eq.s32.totalorder %v686, 1
        %v691 = vsel %vm687, %v665, 0.0
        %v692 = vsel %vm688, %v664, 0.0
        %v693 = vsel %vm689, %v663, 0.0
        %v694 = vsel %vm690, %v666, 0.0
        %v695 = vadd.f32 %v618, %v691
        %v696 = vadd.f32 %v619, %v692
        %v697 = vadd.f32 %v620, %v693
        %v698 = vadd.f32 %v621, %v694
        %s699 = scalar_lea.vmem [#allocation7], 64
        %v700 = vld [vmem:[%s699] sm:$0xf]
        %v701 = vld [vmem:[%s699 + $0x4] sm:$0xf]
        %v702 = vld [vmem:[%s699 + $0x8] sm:$0xf]
        %v703 = vld [vmem:[%s699 + $0xc] sm:$0xf]
        %v708 = vunpack.c.l.b16 %v700
        %v709 = vunpack.c.l.b16 %v701
        %v710 = vunpack.c.l.b16 %v702
        %v711 = vunpack.c.l.b16 %v703
        %v712 = vpack.c.b16 %v709, %v708
        %v713 = vpack.c.b16 %v711, %v710
        %716 = vmatpush.bf16.msra.mxu0 0
        %717 = vmatpush.bf16.msra.mxu0 0
        %718 = vmatpush.bf16.msra.mxu0 0
        %719 = vmatpush.bf16.msra.mxu0 0
        %720 = vmatpush.bf16.msra.mxu0 0
        %721 = vmatpush.bf16.msra.mxu0 0
        %722 = vmatpush.bf16.msra.mxu0 %v713
        %723 = vmatpush.bf16.msra.mxu0 %v712
        %724 = vmatmul.bf16.gmra.mxu0 %v444
        %v725 = vpop.f32.mrf.mxu0
        %v726 = vadd.f32 0.0, %v725
        %v727 = vpop.f32.mrf.mxu0
        %v728 = vadd.f32 0.0, %v727
        %729 = vmatmul.bf16.gmra.mxu0 %v447
        %v730 = vpop.f32.mrf.mxu0
        %v731 = vadd.f32 0.0, %v730
        %v732 = vpop.f32.mrf.mxu0
        %v733 = vadd.f32 0.0, %v732
        %734 = vdwg.mxu0
        %v735 = vrot.slane %v726, 2
        %v736 = vrot.slane %v728, 2
        %v737 = vrot.slane %v731, 2
        %v738 = vrot.slane %v733, 2
        %vm739 = vcmp.lt.s32.totalorder %v352, 6
        %v740 = vsel %vm739, %v737, %v738
        %v741 = vsel %vm739, %v736, %v737
        %v742 = vsel %vm739, %v735, %v736
        %v743 = vsel %vm739, %v738, %v735
        %v744 = vadd.s32 %v400, 2
        %v745 = vadd.s32 %v401, 2
        %v746 = vadd.s32 %v402, 2
        %v747 = vadd.s32 %v403, 2
        %vm748 = vcmp.ge.s32.totalorder %v744, 0
        %vm749 = vcmp.ge.s32.totalorder %v745, 0
        %vm750 = vcmp.ge.s32.totalorder %v746, 0
        %vm751 = vcmp.ge.s32.totalorder %v747, 0
        %vm752 = vcmp.lt.s32.totalorder %v744, 16
        %vm753 = vcmp.lt.s32.totalorder %v745, 16
        %vm754 = vcmp.lt.s32.totalorder %v746, 16
        %vm755 = vcmp.lt.s32.totalorder %v747, 16
        %vm756 = vmand %vm748, %vm752
        %vm757 = vmand %vm749, %vm753
        %vm758 = vmand %vm750, %vm754
        %vm759 = vmand %vm751, %vm755
        %v760 = vsel %vm756, 1, 0
        %v761 = vsel %vm757, 1, 0
        %v762 = vsel %vm758, 1, 0
        %v763 = vsel %vm759, 1, 0
        %vm764 = vcmp.eq.s32.totalorder %v760, 1
        %vm765 = vcmp.eq.s32.totalorder %v761, 1
        %vm766 = vcmp.eq.s32.totalorder %v762, 1
        %vm767 = vcmp.eq.s32.totalorder %v763, 1
        %v768 = vsel %vm764, %v742, 0.0
        %v769 = vsel %vm765, %v741, 0.0
        %v770 = vsel %vm766, %v740, 0.0
        %v771 = vsel %vm767, %v743, 0.0
        %v772 = vadd.f32 %v695, %v768
        %v773 = vadd.f32 %v696, %v769
        %v774 = vadd.f32 %v697, %v770
        %v775 = vadd.f32 %v698, %v771
        %v776 = vld [vmem:[%s4] sm:$0x1]
        %v778 = vperm.slane %v776, 0
        %v780 = vadd.f32 %v772, %v778
        %v781 = vadd.f32 %v773, %v778
        %v782 = vadd.f32 %v774, %v778
        %v783 = vadd.f32 %v775, %v778
        %v784 = vmax.f32 %v780, 0.0
        %v785 = vmax.f32 %v781, 0.0
        %v786 = vmax.f32 %v782, 0.0
        %v787 = vmax.f32 %v783, 0.0
        %v788 = vpack.c.bf16 %v785, %v784
        %v789 = vpack.c.bf16 %v787, %v786
        %v790 = vld [vmem:[#allocation8] sm:$0xf]
        %v791 = vld [vmem:[#allocation8 + $0x4] sm:$0xf]
        %v792 = vld [vmem:[#allocation8 + $0x8] sm:$0xf]
        %v793 = vld [vmem:[#allocation8 + $0xc] sm:$0xf]
        %v794 = vld [vmem:[#allocation8 + $0x10] sm:$0xf]
        %v795 = vld [vmem:[#allocation8 + $0x14] sm:$0xf]
        %v796 = vld [vmem:[#allocation8 + $0x18] sm:$0xf]
        %v797 = vld [vmem:[#allocation8 + $0x1c] sm:$0xf]
        %v806 = vunpack.c.l.b16 %v790
        %v807 = vunpack.c.l.b16 %v791
        %v808 = vunpack.c.l.b16 %v792
        %v809 = vunpack.c.l.b16 %v793
        %v810 = vunpack.c.l.b16 %v794
        %v811 = vunpack.c.l.b16 %v795
        %v812 = vunpack.c.l.b16 %v796
        %v813 = vunpack.c.l.b16 %v797
        %v814 = vpack.c.b16 %v807, %v806
        %v815 = vpack.c.b16 %v809, %v808
        %v816 = vpack.c.b16 %v811, %v810
        %v817 = vpack.c.b16 %v813, %v812
        %vm822 = vcmask 523264
        %v824 = vsel %vm822, %v788, 0
        %v827 = vsel %vm822, %v789, 0
        %829 = vmatpush.bf16.msra.mxu0 0
        %830 = vmatpush.bf16.msra.mxu0 0
        %831 = vmatpush.bf16.msra.mxu0 0
        %832 = vmatpush.bf16.msra.mxu0 0
        %833 = vmatpush.bf16.msra.mxu0 %v817
        %834 = vmatpush.bf16.msra.mxu0 %v816
        %835 = vmatpush.bf16.msra.mxu0 %v815
        %836 = vmatpush.bf16.msra.mxu0 %v814
        %837 = vmatmul.bf16.gmra.mxu0 %v824
        %v838 = vpop.f32.mrf.mxu0
        %v839 = vadd.f32 0.0, %v838
        %v840 = vpop.f32.mrf.mxu0
        %v841 = vadd.f32 0.0, %v840
        %842 = vmatmul.bf16.gmra.mxu0 %v827
        %v843 = vpop.f32.mrf.mxu0
        %v844 = vadd.f32 0.0, %v843
        %v845 = vpop.f32.mrf.mxu0
        %v846 = vadd.f32 0.0, %v845
        %847 = vdwg.mxu0
        %v848 = vrot.slane %v839, 7
        %v849 = vrot.slane %v841, 7
        %v850 = vrot.slane %v844, 7
        %v851 = vrot.slane %v846, 7
        %v852 = vsel %vm545, %v850, %v851
        %v853 = vsel %vm545, %v849, %v850
        %v854 = vsel %vm545, %v848, %v849
        %v855 = vsel %vm545, %v851, %v848
        %v856 = vsel %vm570, %v855, 0.0
        %v857 = vsel %vm571, %v854, 0.0
        %v858 = vsel %vm572, %v853, 0.0
        %v859 = vsel %vm573, %v852, 0.0
        %s860 = scalar_lea.vmem [#allocation8], 32
        %v861 = vld [vmem:[%s860] sm:$0xf]
        %v862 = vld [vmem:[%s860 + $0x4] sm:$0xf]
        %v863 = vld [vmem:[%s860 + $0x8] sm:$0xf]
        %v864 = vld [vmem:[%s860 + $0xc] sm:$0xf]
        %v865 = vld [vmem:[%s860 + $0x10] sm:$0xf]
        %v866 = vld [vmem:[%s860 + $0x14] sm:$0xf]
        %v867 = vld [vmem:[%s860 + $0x18] sm:$0xf]
        %v868 = vld [vmem:[%s860 + $0x1c] sm:$0xf]
        %v877 = vunpack.c.l.b16 %v861
        %v878 = vunpack.c.l.b16 %v862
        %v879 = vunpack.c.l.b16 %v863
        %v880 = vunpack.c.l.b16 %v864
        %v881 = vunpack.c.l.b16 %v865
        %v882 = vunpack.c.l.b16 %v866
        %v883 = vunpack.c.l.b16 %v867
        %v884 = vunpack.c.l.b16 %v868
        %v885 = vpack.c.b16 %v878, %v877
        %v886 = vpack.c.b16 %v880, %v879
        %v887 = vpack.c.b16 %v882, %v881
        %v888 = vpack.c.b16 %v884, %v883
        %893 = vmatpush.bf16.msra.mxu0 0
        %894 = vmatpush.bf16.msra.mxu0 0
        %895 = vmatpush.bf16.msra.mxu0 0
        %896 = vmatpush.bf16.msra.mxu0 0
        %897 = vmatpush.bf16.msra.mxu0 %v888
        %898 = vmatpush.bf16.msra.mxu0 %v887
        %899 = vmatpush.bf16.msra.mxu0 %v886
        %900 = vmatpush.bf16.msra.mxu0 %v885
        %901 = vmatmul.bf16.gmra.mxu0 %v824
        %v902 = vpop.f32.mrf.mxu0
        %v903 = vadd.f32 0.0, %v902
        %v904 = vpop.f32.mrf.mxu0
        %v905 = vadd.f32 0.0, %v904
        %906 = vmatmul.bf16.gmra.mxu0 %v827
        %v907 = vpop.f32.mrf.mxu0
        %v908 = vadd.f32 0.0, %v907
        %v909 = vpop.f32.mrf.mxu0
        %v910 = vadd.f32 0.0, %v909
        %911 = vdwg.mxu0
        %v912 = vadd.f32 %v856, %v903
        %v913 = vadd.f32 %v857, %v905
        %v914 = vadd.f32 %v858, %v908
        %v915 = vadd.f32 %v859, %v910
        %s916 = scalar_lea.vmem [#allocation8], 64
        %v917 = vld [vmem:[%s916] sm:$0xf]
        %v918 = vld [vmem:[%s916 + $0x4] sm:$0xf]
        %v919 = vld [vmem:[%s916 + $0x8] sm:$0xf]
        %v920 = vld [vmem:[%s916 + $0xc] sm:$0xf]
        %v921 = vld [vmem:[%s916 + $0x10] sm:$0xf]
        %v922 = vld [vmem:[%s916 + $0x14] sm:$0xf]
        %v923 = vld [vmem:[%s916 + $0x18] sm:$0xf]
        %v924 = vld [vmem:[%s916 + $0x1c] sm:$0xf]
        %v933 = vunpack.c.l.b16 %v917
        %v934 = vunpack.c.l.b16 %v918
        %v935 = vunpack.c.l.b16 %v919
        %v936 = vunpack.c.l.b16 %v920
        %v937 = vunpack.c.l.b16 %v921
        %v938 = vunpack.c.l.b16 %v922
        %v939 = vunpack.c.l.b16 %v923
        %v940 = vunpack.c.l.b16 %v924
        %v941 = vpack.c.b16 %v934, %v933
        %v942 = vpack.c.b16 %v936, %v935
        %v943 = vpack.c.b16 %v938, %v937
        %v944 = vpack.c.b16 %v940, %v939
        %949 = vmatpush.bf16.msra.mxu0 0
        %950 = vmatpush.bf16.msra.mxu0 0
        %951 = vmatpush.bf16.msra.mxu0 0
        %952 = vmatpush.bf16.msra.mxu0 0
        %953 = vmatpush.bf16.msra.mxu0 %v944
        %954 = vmatpush.bf16.msra.mxu0 %v943
        %955 = vmatpush.bf16.msra.mxu0 %v942
        %956 = vmatpush.bf16.msra.mxu0 %v941
        %957 = vmatmul.bf16.gmra.mxu0 %v824
        %v958 = vpop.f32.mrf.mxu0
        %v959 = vadd.f32 0.0, %v958
        %v960 = vpop.f32.mrf.mxu0
        %v961 = vadd.f32 0.0, %v960
        %962 = vmatmul.bf16.gmra.mxu0 %v827
        %v963 = vpop.f32.mrf.mxu0
        %v964 = vadd.f32 0.0, %v963
        %v965 = vpop.f32.mrf.mxu0
        %v966 = vadd.f32 0.0, %v965
        %967 = vdwg.mxu0
        %v968 = vrot.slane %v959, 1
        %v969 = vrot.slane %v961, 1
        %v970 = vrot.slane %v964, 1
        %v971 = vrot.slane %v966, 1
        %v972 = vsel %vm662, %v970, %v971
        %v973 = vsel %vm662, %v969, %v970
        %v974 = vsel %vm662, %v968, %v969
        %v975 = vsel %vm662, %v971, %v968
        %v976 = vsel %vm687, %v974, 0.0
        %v977 = vsel %vm688, %v973, 0.0
        %v978 = vsel %vm689, %v972, 0.0
        %v979 = vsel %vm690, %v975, 0.0
        %v980 = vadd.f32 %v912, %v976
        %v981 = vadd.f32 %v913, %v977
        %v982 = vadd.f32 %v914, %v978
        %v983 = vadd.f32 %v915, %v979
        %v984 = vld [vmem:[%s6] sm:$0x1]
        %v986 = vperm.slane %v984, 0
        %v988 = vadd.f32 %v980, %v986
        %v989 = vadd.f32 %v981, %v986
        %v990 = vadd.f32 %v982, %v986
        %v991 = vadd.f32 %v983, %v986
        %v992 = vpack.c.bf16 %v988, %v988
        %v993 = vpack.c.bf16 %v989, %v989
        %v994 = vpack.c.bf16 %v990, %v990
        %v995 = vpack.c.bf16 %v991, %v991
        %996 = vst [vmem:[%s347] sm:$0xf] %v992
        %997 = vst [vmem:[%s347 + $0x4] sm:$0xf] %v993
        %998 = vst [vmem:[%s347 + $0x8] sm:$0xf] %v994
        %999 = vst [vmem:[%s347 + $0xc] sm:$0xf] %v995
        %s1000 = sand.u32 %s186, 1
        %s1001 = scalar_lea.sflag [#allocation4], %s1000
        %s1002 = sand.u32 %s186, 1
        %s1003 = smul.addr %s1002, 16
        %s1004 = scalar_lea.vmem [#allocation10], %s1003
        // Predicated region
        $region65: #{tpu_custom_call.1} parent=47 // pred_check
          %p1005 = pneg %p196
        $region66: #{tpu_custom_call.1} parent=47 // pred_check_branch
          %1007 = sbr.rel (%p1005) target = $region68
        $region67: #{tpu_custom_call.1} parent=47 // pred_region
          %s1008 = smul.u32 2, %s26
          %1010 = vsyncadd %s1001, 0
          %s1011 = smul.addr %s1008, 2
          %s1012 = smul.addr %s1011, 4
          %s1013 = scalar_lea.hbm %s7, %s1012
          %s1014 = sshll.u32 %s1004, 4
          %s1015 = int_to_ptr.vmem [resolvable:$true] %s1014
          %s1016 = sshll.u32 %s1013, 4
          %s1017 = int_to_ptr.hbm [resolvable:$true] %s1016
          %1022 = dma.vmem_to_hbm [thread:$0]  %s1015, 256, %s1017, %s1001, 64, 64, 4
        $region68: #{tpu_custom_call.1} parent=47 // pred_fallthru
          _
      $region48: #{tpu_custom_call.1} parent=5 // pred_fallthru
        _
      %p1023 = scmp.le.s32.totalorder 2, %s21
      // Predicated region
      $region69: #{tpu_custom_call.1} parent=5 // pred_check
        %p1024 = pneg %p1023
      $region70: #{tpu_custom_call.1} parent=5 // pred_check_branch
        %1026 = sbr.rel (%p1024) target = $region72
      $region71: #{tpu_custom_call.1} parent=5 // pred_region
        %s1027 = ssub.s32 %s21, 2
        // Predicated region
        $region73: #{tpu_custom_call.1} parent=71 // pred_check
          %p1028 = pneg %p202
        $region74: #{tpu_custom_call.1} parent=71 // pred_check_branch
          %1030 = sbr.rel (%p1028) target = $region76
        $region75: #{tpu_custom_call.1} parent=71 // pred_region
          %s1031 = sand.u32 %s187, 1
          %s1032 = scalar_lea.sflag [#allocation4], %s1031
          %s1033 = sand.u32 %s187, 1
          %s1034 = smul.addr %s1033, 16
          %s1035 = scalar_lea.vmem [#allocation10], %s1034
          %1037 = dma.done %s1032, 256
        $region76: #{tpu_custom_call.1} parent=71 // pred_fallthru
          _
      $region72: #{tpu_custom_call.1} parent=5 // pred_fallthru
        _
    $region6: #{tpu_custom_call.1} parent=1 // loop_footer
      %s25 = sadd.s32 1, %s21
    $region7: #{tpu_custom_call.1} parent=1 // loop_footer_branch
      %20 = sbr.rel target = $region3
    $region8: #{tpu_custom_call.1} parent=1 // loop_exit
      _
    %1038 = vsyncpa [#allocation3], 1
    %s1039 = scalar_lea.sflag [#allocation3], 1
    %1040 = vsyncpa %s1039, 1
    %1041 = vsyncpa [#allocation6], 1
    %1042 = vsyncpa [#allocation9], 1
    %1043 = vsyncpa [#allocation4], 1
    %s1044 = scalar_lea.sflag [#allocation4], 1
    %1045 = vsyncpa %s1044, 1

</llo_original>
